<compile_context>
chip_gen: v7x
topology: tpu7x:2x2x1
jax: 0.10.0
libtpu: 0.0.40
codegen_flags: <defaults>
</compile_context>

<pallas_src>
import jax
import jax.numpy as jnp
from jax import lax
from jax.experimental import pallas as pl
from jax.experimental.pallas import tpu as pltpu


# --------------------------------------------------------------------------- #
# Kernel 1: K / V projection (once per batch element)
# --------------------------------------------------------------------------- #
def _kv_proj_kernel(x_ref, wk_ref, wv_ref, kT_ref, v_ref):
    xb = x_ref[...]                                   # (tp, C) bf16
    # K^T tile: contract the C axes of Wk (C8, C) and x (tp, C) -> (C8, tp).
    # Output is lane-dense along the spatial axis (good store, good score matmul).
    kT_ref[...] = lax.dot_general(
        wk_ref[...], xb,
        dimension_numbers=(((1,), (1,)), ((), ())),
        preferred_element_type=jnp.float32).astype(jnp.bfloat16)
    # V tile: (tp, C).  Lane-dense when C is a multiple of 128 (production configs).
    v_ref[...] = jnp.dot(xb, wv_ref[...],
                         preferred_element_type=jnp.float32).astype(jnp.bfloat16)


# --------------------------------------------------------------------------- #
# Kernel 2: flash-style spatial attention + output projection + residual
# --------------------------------------------------------------------------- #
def _sam_flash_kernel(xq_ref, kT_ref, v_ref, wq_ref, bq_ref, wo_ref, bo_ref,
                      o_ref, q_sc, m_sc, l_sc, acc_sc):
    ki = pl.program_id(2)
    nk = pl.num_programs(2)

    # ---- init for a new (batch, q-tile): project q once, reset softmax state.
    @pl.when(ki == 0)
    def _():
        qf = jnp.dot(xq_ref[...], wq_ref[...],
                     preferred_element_type=jnp.float32) + bq_ref[...]
        q_sc[...] = qf.astype(jnp.bfloat16)
        m_sc[...] = jnp.full_like(m_sc, -jnp.inf)
        l_sc[...] = jnp.zeros_like(l_sc)
        acc_sc[...] = jnp.zeros_like(acc_sc)

    # ---- scores for this kv tile: q (tq, C8) @ K^T (C8, tkv) -> (tq, tkv) f32.
    s = jnp.dot(q_sc[...], kT_ref[...], preferred_element_type=jnp.float32)

    # ---- online softmax update (f32 stats / accumulator).
    # TODO(synk): on v6e/v7x a bf16 exp (p = jnp.exp((s - m_new).astype(bf16)))
    # roughly doubles EUP throughput; keep f32 on v5e (no bf16 EUP).
    m_prev = m_sc[...]
    m_new = jnp.maximum(m_prev, jnp.max(s, axis=-1, keepdims=True))
    alpha = jnp.exp(m_prev - m_new)
    p = jnp.exp(s - m_new)
    l_sc[...] = alpha * l_sc[...] + jnp.sum(p, axis=-1, keepdims=True)
    acc_sc[...] = alpha * acc_sc[...] + jnp.dot(
        p.astype(jnp.bfloat16), v_ref[...], preferred_element_type=jnp.float32)
    m_sc[...] = m_new

    # ---- finalize: normalize, output projection, (folded) bias, residual, store.
    @pl.when(ki == nk - 1)
    def _():
        inv_l = pl.reciprocal(l_sc[...], approx=True)         # EUP, not VALU divide
        out = (acc_sc[...] * inv_l).astype(jnp.bfloat16)
        y = (jnp.dot(out, wo_ref[...], preferred_element_type=jnp.float32)
             + bo_ref[...] + xq_ref[...].astype(jnp.float32))  # residual add in f32
        # TODO(synk): for C < 128 this store is lane-sparse (masked vst); production
        # configs should keep C a multiple of 128 for lane-dense stores (matters most
        # on v5e's single vector-store slot).
        o_ref[...] = y.astype(o_ref.dtype)


def _largest_divisor_tile(n, multiple, cap):
    """Largest divisor of n that is a multiple of `multiple` and <= cap, else n."""
    best = None
    t = multiple
    while t <= min(n, cap):
        if n % t == 0:
            best = t
        t += multiple
    return best if best is not None else n


def complex_spatial_attention(x_nchw, params, *, tq=None, tkv=None, tp=None,
                              vmem_limit_bytes=48 * 1024 * 1024):
    """x_nchw: (B, C, H, W) float32; params: dict of 1x1 conv weights/biases.

    vmem_limit_bytes defaults to 48 MiB: comfortably inside v5e/v6e's 128 MiB and
    keeps double-buffering headroom under v7x's 64 MiB physical VMEM.
    """
    B, C, H, W = x_nchw.shape
    HW = H * W
    C8 = C // 8
    f32, bf16 = jnp.float32, jnp.bfloat16

    # Tile selection.  bf16 activations -> sublane tiles in multiples of 16; the
    # K^T stream puts the kv axis on lanes -> tkv in multiples of 128 (or == HW).
    if tq is None:
        tq = _largest_divisor_tile(HW, 16, 1024)
        # v7x has 2 TensorCores: keep B*nq >= 2 so the parallel axes feed both.
        if B * (HW // tq) < 2:
            tq = _largest_divisor_tile(HW, 16, max(16, HW // 2))
    if tkv is None:
        tkv = _largest_divisor_tile(HW, 128, 512)
    if tp is None:
        tp = _largest_divisor_tile(HW, 128, 512)
    assert HW % tq == 0 and HW % tkv == 0 and HW % tp == 0
    nq, nk = HW // tq, HW // tkv

    # NCHW -> (B, HW, C) bf16.  Transpose + reshape + cast fuse into one XLA pass,
    # so the bf16 re-write is half the bytes of an f32 layout change.
    # TODO(synk): keep the surrounding model channels-last to drop this pass and
    # the final transpose entirely.
    x = jnp.transpose(x_nchw, (0, 2, 3, 1)).reshape(B, HW, C).astype(bf16)

    # Conv weights (O, C, 1, 1) -> matmul form; bf16 MXU operands, f32 biases.
    wq_t = params["wq"].reshape(C8, C).T.astype(bf16)          # (C, C8)
    wk = params["wk"].reshape(C8, C).astype(bf16)              # (C8, C) (used "NT")
    wv_t = params["wv"].reshape(C, C).T.astype(bf16)           # (C, C)
    wo_t_f32 = params["wo"].reshape(C, C).T                    # (C, C) f32
    wo_t = wo_t_f32.astype(bf16)
    bq = params["bq"].reshape(1, C8).astype(f32)
    # b_k is inert (cancels in softmax); b_v commutes with the weighted average:
    bo_fold = (params["bv"].reshape(1, C) @ wo_t_f32
               + params["bo"].reshape(1, C)).astype(f32)       # (1, C)

    # ---------------- pass 1: K^T, V projection (once per batch element) -------
    def pconst(shape):
        return pl.BlockSpec(shape, lambda b, pi: tuple(0 for _ in shape))

    kT, v = pl.pallas_call(
        _kv_proj_kernel,
        out_shape=(jax.ShapeDtypeStruct((B, C8, HW), bf16),
                   jax.ShapeDtypeStruct((B, HW, C), bf16)),
        grid_spec=pltpu.PrefetchScalarGridSpec(
            num_scalar_prefetch=0,
            grid=(B, HW // tp),
            in_specs=[
                pl.BlockSpec((pl.Squeezed(), tp, C), lambda b, pi: (b, pi, 0)),
                pconst(wk.shape), pconst(wv_t.shape),
            ],
            out_specs=[
                pl.BlockSpec((pl.Squeezed(), C8, tp), lambda b, pi: (b, 0, pi)),
                pl.BlockSpec((pl.Squeezed(), tp, C), lambda b, pi: (b, pi, 0)),
            ],
        ),
        compiler_params=pltpu.CompilerParams(
            dimension_semantics=("parallel", "parallel"),
            vmem_limit_bytes=vmem_limit_bytes,
        ),
    )(x, wk, wv_t)

    # ---------------- pass 2: flash attention + out projection + residual ------
    def aconst(shape):
        return pl.BlockSpec(shape, lambda b, qi, ki: tuple(0 for _ in shape))

    # TODO(synk): if DMA on the K^T / V streams is exposed (small C), sweep
    # pipeline_mode=pl.Buffered(3) on those specs.
    out = pl.pallas_call(
        _sam_flash_kernel,
        out_shape=jax.ShapeDtypeStruct((B, HW, C), x_nchw.dtype),
        grid_spec=pltpu.PrefetchScalarGridSpec(
            num_scalar_prefetch=0,
            grid=(B, nq, nk),
            in_specs=[
                # x, q-tile view (resident across kv axis; q projection + residual)
                pl.BlockSpec((pl.Squeezed(), tq, C), lambda b, qi, ki: (b, qi, 0)),
                # precomputed K^T / V tiles streaming along the kv axis
                pl.BlockSpec((pl.Squeezed(), C8, tkv), lambda b, qi, ki: (b, 0, ki)),
                pl.BlockSpec((pl.Squeezed(), tkv, C), lambda b, qi, ki: (b, ki, 0)),
                aconst(wq_t.shape), aconst(bq.shape),
                aconst(wo_t.shape), aconst(bo_fold.shape),
            ],
            out_specs=pl.BlockSpec((pl.Squeezed(), tq, C),
                                   lambda b, qi, ki: (b, qi, 0)),
            scratch_shapes=[
                pltpu.VMEM((tq, C8), bf16),     # projected q tile
                pltpu.VMEM((tq, 1), f32),       # running row max
                pltpu.VMEM((tq, 1), f32),       # running row sum
                pltpu.VMEM((tq, C), f32),       # output accumulator
            ],
        ),
        compiler_params=pltpu.CompilerParams(
            dimension_semantics=("parallel", "parallel", "arbitrary"),
            vmem_limit_bytes=vmem_limit_bytes,
        ),
    )(x, kT, v, wq_t, bq, wo_t, bo_fold)

    # (B, HW, C) -> NCHW
    return jnp.transpose(out.reshape(B, H, W, C), (0, 3, 1, 2))


def init_params(key, channel):
    """Deterministic parameter init (shapes match nn.Conv2d(.., 1) weights/biases)."""
    c8 = channel // 8
    ks = jax.random.split(key, 8)
    scale = 0.1
    return {
        "wq": scale * jax.random.normal(ks[0], (c8, channel, 1, 1), jnp.float32),
        "bq": scale * jax.random.normal(ks[1], (c8,), jnp.float32),
        "wk": scale * jax.random.normal(ks[2], (c8, channel, 1, 1), jnp.float32),
        "bk": scale * jax.random.normal(ks[3], (c8,), jnp.float32),
        "wv": scale * jax.random.normal(ks[4], (channel, channel, 1, 1), jnp.float32),
        "bv": scale * jax.random.normal(ks[5], (channel,), jnp.float32),
        "wo": scale * jax.random.normal(ks[6], (channel, channel, 1, 1), jnp.float32),
        "bo": scale * jax.random.normal(ks[7], (channel,), jnp.float32),
    }


def _reference(x_nchw, params):
    """Pure-JAX f32 reference mirroring the PyTorch forward (NCHW)."""
    B, C, H, W = x_nchw.shape
    HW = H * W
    C8 = C // 8

    def conv1x1(x, w, b):  # x: (B,C,H,W), w: (O,C,1,1)
        y = jnp.einsum("bchw,oc->bohw", x, w.reshape(w.shape[0], C))
        return y + b[None, :, None, None]

    q = conv1x1(x_nchw, params["wq"], params["bq"]).reshape(B, C8, HW).transpose(0, 2, 1)
    k = conv1x1(x_nchw, params["wk"], params["bk"]).reshape(B, C8, HW)
    v = conv1x1(x_nchw, params["wv"], params["bv"]).reshape(B, C, HW)
    a = jax.nn.softmax(jnp.einsum("bqc,bck->bqk", q, k), axis=-1)
    o = jnp.einsum("bck,bqk->bcq", v, a).reshape(B, C, H, W)
    return conv1x1(o, params["wo"], params["bo"]) + x_nchw


if __name__ == "__main__":
    key = jax.random.PRNGKey(0)
    kx, kp = jax.random.split(key)

    B, C, H, W = 2, 16, 16, 16   # channel must be a multiple of 8
    x = jax.random.normal(kx, (B, C, H, W), jnp.float32)
    params = init_params(kp, C)

    # tq=tkv=128 so both the q tiling (nq=2) and the online-softmax kv loop (nk=2)
    # are exercised.
    y = complex_spatial_attention(x, params, tq=128, tkv=128)
    y = jax.block_until_ready(y)

    y_ref = _reference(x, params)
    assert y.shape == (B, C, H, W)
    # bf16 activations / MXU operands with f32 accumulation -> bf16 tolerance.
    assert jnp.allclose(y, y_ref, atol=3e-2, rtol=3e-2), \
        float(jnp.max(jnp.abs(y - y_ref)))

    print("KERNEL_OK")
</pallas_src>

<mosaic_0001>
module attributes {stable_mosaic.version = 11 : i64} {
  func.func @_kv_proj_kernel(%arg0: i32, %arg1: i32, %arg2: memref<1x256x16xbf16, #tpu.memory_space<vmem>>, %arg3: memref<2x16xbf16, #tpu.memory_space<vmem>>, %arg4: memref<16x16xbf16, #tpu.memory_space<vmem>>, %arg5: memref<1x2x256xbf16, #tpu.memory_space<vmem>>, %arg6: memref<1x256x16xbf16, #tpu.memory_space<vmem>>) attributes {dimension_semantics = [#tpu.dimension_semantics<parallel>, #tpu.dimension_semantics<parallel>], iteration_bounds = array<i64: 2, 1>, scalar_prefetch = 0 : i64, scratch_operands = 0 : i64, tpu.core_type = #tpu.core_type<tc>, window_params = [{transform_indices = @transform_0, window_bounds = array<i64: 1, 256, 16>}, {pipeline_mode = #tpu.pipeline_mode<synchronous>, transform_indices = @transform_1, window_bounds = array<i64: 2, 16>}, {pipeline_mode = #tpu.pipeline_mode<synchronous>, transform_indices = @transform_2, window_bounds = array<i64: 16, 16>}, {transform_indices = @transform_3, window_bounds = array<i64: 1, 2, 256>}, {transform_indices = @transform_4, window_bounds = array<i64: 1, 256, 16>}]} {
    %c0 = arith.constant 0 : index
    %c0_0 = arith.constant 0 : index
    %c0_1 = arith.constant 0 : index
    %0 = vector.load %arg2[%c0, %c0_0, %c0_1] : memref<1x256x16xbf16, #tpu.memory_space<vmem>>, vector<1x256x16xbf16>
    %1 = vector.shape_cast %0 : vector<1x256x16xbf16> to vector<256x16xbf16>
    %c0_2 = arith.constant 0 : index
    %c0_3 = arith.constant 0 : index
    %2 = vector.load %arg3[%c0_2, %c0_3] : memref<2x16xbf16, #tpu.memory_space<vmem>>, vector<2x16xbf16>
    %cst = arith.constant dense<0.000000e+00> : vector<2x256xf32>
    %3 = tpu.matmul %2, %1, %cst {dimension_numbers = #tpu.dot_dimension_numbers<[1], [1], [0], [0], [0, 0, 1, 0], [], []>} : vector<2x16xbf16>, vector<256x16xbf16>, vector<2x256xf32> -> vector<2x256xf32>
    %4 = arith.truncf %3 : vector<2x256xf32> to vector<2x256xbf16>
    %c0_4 = arith.constant 0 : index
    %c0_5 = arith.constant 0 : index
    %c0_6 = arith.constant 0 : index
    %5 = vector.load %arg5[%c0_4, %c0_5, %c0_6] : memref<1x2x256xbf16, #tpu.memory_space<vmem>>, vector<1x2x256xbf16>
    %6 = vector.shape_cast %5 : vector<1x2x256xbf16> to vector<2x256xbf16>
    %7 = vector.shape_cast %4 : vector<2x256xbf16> to vector<1x2x256xbf16>
    tpu.vector_store %arg5[%c0_4, %c0_5, %c0_6], %7 {strides = array<i32>} : memref<1x2x256xbf16, #tpu.memory_space<vmem>>, vector<1x2x256xbf16>,
    %c0_7 = arith.constant 0 : index
    %c0_8 = arith.constant 0 : index
    %8 = vector.load %arg4[%c0_7, %c0_8] : memref<16x16xbf16, #tpu.memory_space<vmem>>, vector<16x16xbf16>
    %cst_9 = arith.constant dense<0.000000e+00> : vector<256x16xf32>
    %9 = tpu.matmul %1, %8, %cst_9 {dimension_numbers = #tpu.dot_dimension_numbers<[1], [0], [0], [1], [0, 0, 1, 1], [], []>} : vector<256x16xbf16>, vector<16x16xbf16>, vector<256x16xf32> -> vector<256x16xf32>
    %10 = arith.truncf %9 : vector<256x16xf32> to vector<256x16xbf16>
    %c0_10 = arith.constant 0 : index
    %c0_11 = arith.constant 0 : index
    %c0_12 = arith.constant 0 : index
    %11 = vector.load %arg6[%c0_10, %c0_11, %c0_12] : memref<1x256x16xbf16, #tpu.memory_space<vmem>>, vector<1x256x16xbf16>
    %12 = vector.shape_cast %11 : vector<1x256x16xbf16> to vector<256x16xbf16>
    %13 = vector.shape_cast %10 : vector<256x16xbf16> to vector<1x256x16xbf16>
    tpu.vector_store %arg6[%c0_10, %c0_11, %c0_12], %13 {strides = array<i32>} : memref<1x256x16xbf16, #tpu.memory_space<vmem>>, vector<1x256x16xbf16>,
    return
  }
  func.func @transform_0(%arg0: i32, %arg1: i32) -> (i32, i32, i32) {
    %c0_i32 = arith.constant 0 : i32
    %c0_i32_0 = arith.constant 0 : i32
    return %arg0, %arg1, %c0_i32 : i32, i32, i32
  }
  func.func @transform_1(%arg0: i32, %arg1: i32) -> (i32, i32) {
    %c0_i32 = arith.constant 0 : i32
    %c0_i32_0 = arith.constant 0 : i32
    %c0_i32_1 = arith.constant 0 : i32
    return %c0_i32, %c0_i32_0 : i32, i32
  }
  func.func @transform_2(%arg0: i32, %arg1: i32) -> (i32, i32) {
    %c0_i32 = arith.constant 0 : i32
    %c0_i32_0 = arith.constant 0 : i32
    %c0_i32_1 = arith.constant 0 : i32
    return %c0_i32, %c0_i32_0 : i32, i32
  }
  func.func @transform_3(%arg0: i32, %arg1: i32) -> (i32, i32, i32) {
    %c0_i32 = arith.constant 0 : i32
    %c0_i32_0 = arith.constant 0 : i32
    return %arg0, %c0_i32, %arg1 : i32, i32, i32
  }
  func.func @transform_4(%arg0: i32, %arg1: i32) -> (i32, i32, i32) {
    %c0_i32 = arith.constant 0 : i32
    %c0_i32_0 = arith.constant 0 : i32
    return %arg0, %arg1, %c0_i32 : i32, i32, i32
  }
}

</mosaic_0001>

<llo_original>
// kernel: tpu_custom_call.1
$region0: #{tpu_custom_call.1}
  #allocation0 [shape = 'u32[]', space=smem, size = 0x4, offset = 0x4, fixed_abs, tag = 'smem constant byte address 0x4 - core index']
  #allocation1 [shape = 'u32[144,128]{1,0:T(1,128)}', space=vmem, size = 0x12000, scoped, tag = 'internal scratch']
  %s0 = inlined_call_operand.vmem [shape: bf16[2,256,16], index: 0, kind: input, shape index: {}]
  %s1 = inlined_call_operand.vmem [shape: bf16[2,16], index: 1, kind: input, shape index: {}]
  %s2 = inlined_call_operand.vmem [shape: bf16[16,16], index: 2, kind: input, shape index: {}]
  %s3 = inlined_call_operand.hbm [shape: bf16[2,2,256], index: 3, kind: output, shape index: {0}]
  %s4 = inlined_call_operand.vmem [shape: bf16[2,256,16], index: 4, kind: output, shape index: {1}]
  %5 = xla_tuple %s3, %s4
  %s6 = sld [smem:[#allocation0]]
  $region53: #{tpu_custom_call.1} parent=0
    _
  %s8 = ssub.s32 1, %s6
  %s9 = scalar_select 0, %s8, %s6
  $region1: #{tpu_custom_call.1} parent=0
    #allocation2 [shape = 'u8[2048]{0}', space=vmem, size = 0x800, scoped, tag = 'output window, operand 0']
    #allocation3 [shape = 's32[2]{0}', space=sflag, size = 0x8, scoped, tag = 'scoped memory for tpu_custom_call.1']
    %10 = vsyncpa [#allocation3], 0
    %s11 = scalar_lea.sflag [#allocation3], 1
    %12 = vsyncpa %s11, 0
    loop: start=0, step=1, limit=4
    $region2: #{tpu_custom_call.1} parent=1 // loop_pre_header
      _
    $region3: #{tpu_custom_call.1} parent=1 // loop_header
      %s14 = sphi 0, %s18
      %p15 = scmp.ge.s32.totalorder %s14, 4
      %s21 = sphi 0, %s33
      %s22 = sphi 0, %s29
      %s23 = sphi 0, %s21
      %s24 = sphi 0, %s22
      %s25 = sphi 0, %s23
      %s26 = sphi 0, %s24
      %s38 = sphi 0, %s40
      %s41 = sphi 0, %s38
      %s42 = sphi 0, %s41
      %s58 = sphi 0, %s42
      %s62 = sphi 0, %s62
      %s64 = sphi 0, %s62
      %s65 = sphi 0, %s64
      %s79 = sphi 0, %s65
      %s83 = sphi 0, %s83
      %s85 = sphi 0, %s83
      %s86 = sphi 0, %s85
      %s100 = sphi 0, %s86
      %s108 = sphi 0, %s110
      %s111 = sphi 0, %s108
      %s112 = sphi 0, %s111
      %s128 = sphi 0, %s112
      %s136 = sphi 0, %s138
      %s139 = sphi 0, %s136
      %s140 = sphi 0, %s139
      %s156 = sphi 0, %s140
    $region4: #{tpu_custom_call.1} parent=1 // loop_header_branch
      %17 = sbr.rel (%p15) target = $region8
    $region5: #{tpu_custom_call.1} parent=1 // loop_body
      %s19 = ssub.s32 %s14, 1
      %s20 = ssub.s32 %s14, 2
      %s27 = sadd.s32 1, %s22
      %p28 = scmp.ge.s32.totalorder %s27, 1
      %s29 = scalar_select %p28, 0, %s27
      %s30 = sadd.s32 1, %s21
      %s31 = scalar_select %p28, %s30, %s21
      %p32 = scmp.ge.s32.totalorder %s31, 2
      %s33 = scalar_select %p32, 0, %s31
      %s34 = ssub.s32 %s21, %s33
      %s35 = ssub.s32 %s22, %s29
      %s36 = sor.u32 %s34, %s35
      %p37 = scmp.eq.s32.totalorder %s36, 0
      %s39 = sadd.s32 %s38, 1
      %s40 = scalar_select %p37, %s38, %s39
      %p43 = pneg %p37
      %p44 = scmp.eq.s32.totalorder %s14, 1
      %p45 = por %p43, %p44
      %p46 = scmp.ne.s32.totalorder %s38, %s41
      %p47 = scmp.eq.s32.totalorder %s14, 0
      %p48 = por %p46, %p47
      %p49 = scmp.ne.s32.totalorder %s38, %s41
      %p50 = scmp.eq.s32.totalorder %s19, 1
      %p51 = por %p49, %p50
      %p52 = scmp.ne.s32.totalorder %s41, %s42
      %p53 = scmp.eq.s32.totalorder %s19, 0
      %p54 = por %p52, %p53
      %p55 = scmp.ne.s32.totalorder %s41, %s42
      %p56 = scmp.eq.s32.totalorder %s20, 1
      %p57 = por %p55, %p56
      %p59 = scmp.ne.s32.totalorder %s42, %s58
      %p60 = scmp.eq.s32.totalorder %s20, 0
      %p61 = por %p59, %p60
      %s63 = sadd.s32 %s62, 1
      %p66 = scmp.eq.s32.totalorder %s14, 1
      %p67 = scmp.ne.s32.totalorder %s62, %s64
      %p68 = scmp.eq.s32.totalorder %s14, 0
      %p69 = por %p67, %p68
      %p70 = scmp.ne.s32.totalorder %s62, %s64
      %p71 = scmp.eq.s32.totalorder %s19, 1
      %p72 = por %p70, %p71
      %p73 = scmp.ne.s32.totalorder %s64, %s65
      %p74 = scmp.eq.s32.totalorder %s19, 0
      %p75 = por %p73, %p74
      %p76 = scmp.ne.s32.totalorder %s64, %s65
      %p77 = scmp.eq.s32.totalorder %s20, 1
      %p78 = por %p76, %p77
      %p80 = scmp.ne.s32.totalorder %s65, %s79
      %p81 = scmp.eq.s32.totalorder %s20, 0
      %p82 = por %p80, %p81
      %s84 = sadd.s32 %s83, 1
      %p87 = scmp.eq.s32.totalorder %s14, 1
      %p88 = scmp.ne.s32.totalorder %s83, %s85
      %p89 = scmp.eq.s32.totalorder %s14, 0
      %p90 = por %p88, %p89
      %p91 = scmp.ne.s32.totalorder %s83, %s85
      %p92 = scmp.eq.s32.totalorder %s19, 1
      %p93 = por %p91, %p92
      %p94 = scmp.ne.s32.totalorder %s85, %s86
      %p95 = scmp.eq.s32.totalorder %s19, 0
      %p96 = por %p94, %p95
      %p97 = scmp.ne.s32.totalorder %s85, %s86
      %p98 = scmp.eq.s32.totalorder %s20, 1
      %p99 = por %p97, %p98
      %p101 = scmp.ne.s32.totalorder %s86, %s100
      %p102 = scmp.eq.s32.totalorder %s20, 0
      %p103 = por %p101, %p102
      %s104 = ssub.s32 %s21, %s33
      %s105 = ssub.s32 %s22, %s29
      %s106 = sor.u32 %s104, %s105
      %p107 = scmp.eq.s32.totalorder %s106, 0
      %s109 = sadd.s32 %s108, 1
      %s110 = scalar_select %p107, %s108, %s109
      %p113 = pneg %p107
      %p114 = scmp.eq.s32.totalorder %s14, 1
      %p115 = por %p113, %p114
      %p116 = scmp.ne.s32.totalorder %s108, %s111
      %p117 = scmp.eq.s32.totalorder %s14, 0
      %p118 = por %p116, %p117
      %p119 = scmp.ne.s32.totalorder %s108, %s111
      %p120 = scmp.eq.s32.totalorder %s19, 1
      %p121 = por %p119, %p120
      %p122 = scmp.ne.s32.totalorder %s111, %s112
      %p123 = scmp.eq.s32.totalorder %s19, 0
      %p124 = por %p122, %p123
      %p125 = scmp.ne.s32.totalorder %s111, %s112
      %p126 = scmp.eq.s32.totalorder %s20, 1
      %p127 = por %p125, %p126
      %p129 = scmp.ne.s32.totalorder %s112, %s128
      %p130 = scmp.eq.s32.totalorder %s20, 0
      %p131 = por %p129, %p130
      %s132 = ssub.s32 %s21, %s33
      %s133 = ssub.s32 %s22, %s29
      %s134 = sor.u32 %s132, %s133
      %p135 = scmp.eq.s32.totalorder %s134, 0
      %s137 = sadd.s32 %s136, 1
      %s138 = scalar_select %p135, %s136, %s137
      %p141 = pneg %p135
      %p142 = scmp.eq.s32.totalorder %s14, 1
      %p143 = por %p141, %p142
      %p144 = scmp.ne.s32.totalorder %s136, %s139
      %p145 = scmp.eq.s32.totalorder %s14, 0
      %p146 = por %p144, %p145
      %p147 = scmp.ne.s32.totalorder %s136, %s139
      %p148 = scmp.eq.s32.totalorder %s19, 1
      %p149 = por %p147, %p148
      %p150 = scmp.ne.s32.totalorder %s139, %s140
      %p151 = scmp.eq.s32.totalorder %s19, 0
      %p152 = por %p150, %p151
      %p153 = scmp.ne.s32.totalorder %s139, %s140
      %p154 = scmp.eq.s32.totalorder %s20, 1
      %p155 = por %p153, %p154
      %p157 = scmp.ne.s32.totalorder %s140, %s156
      %p158 = scmp.eq.s32.totalorder %s20, 0
      %p159 = por %p157, %p158
      %p160 = scmp.le.s32.totalorder 1, %s14
      %p161 = scmp.lt.s32.totalorder %s14, 3
      %p162 = pnand %p160, %p161
      %p163 = pneg %p162
      // Predicated region
      $region9: #{tpu_custom_call.1} parent=5 // pred_check
        _
      $region10: #{tpu_custom_call.1} parent=5 // pred_check_branch
        %165 = sbr.rel (%p162) target = $region12
      $region11: #{tpu_custom_call.1} parent=5 // pred_region
        %s166 = ssub.s32 %s14, 1
        // Predicated region
        $region13: #{tpu_custom_call.1} parent=11 // pred_check
          %p167 = pneg %p75
        $region14: #{tpu_custom_call.1} parent=11 // pred_check_branch
          %169 = sbr.rel (%p167) target = $region16
        $region15: #{tpu_custom_call.1} parent=11 // pred_region
          _
        $region16: #{tpu_custom_call.1} parent=11 // pred_fallthru
          _
        // Predicated region
        $region17: #{tpu_custom_call.1} parent=11 // pred_check
          %p170 = pneg %p96
        $region18: #{tpu_custom_call.1} parent=11 // pred_check_branch
          %172 = sbr.rel (%p170) target = $region20
        $region19: #{tpu_custom_call.1} parent=11 // pred_region
          _
        $region20: #{tpu_custom_call.1} parent=11 // pred_fallthru
          _
      $region12: #{tpu_custom_call.1} parent=5 // pred_fallthru
        _
      %p173 = scmp.lt.s32.totalorder %s14, 2
      // Predicated region
      $region21: #{tpu_custom_call.1} parent=5 // pred_check
        %p174 = pneg %p173
      $region22: #{tpu_custom_call.1} parent=5 // pred_check_branch
        %176 = sbr.rel (%p174) target = $region24
      $region23: #{tpu_custom_call.1} parent=5 // pred_region
        // Predicated region
        $region25: #{tpu_custom_call.1} parent=23 // pred_check
          %p177 = pneg %p48
        $region26: #{tpu_custom_call.1} parent=23 // pred_check_branch
          %179 = sbr.rel (%p177) target = $region28
        $region27: #{tpu_custom_call.1} parent=23 // pred_region
          %s180 = smul.u32 32, %s22
          %p181 = scmp.lt.s32.totalorder %s21, 1
          %s182 = scalar_select %p181, %s21, 1
          %p183 = scmp.lt.s32.totalorder %s180, 31
          %s184 = scalar_select %p183, %s180, 31
          %s185 = smul.addr %s182, 32
          %s186 = sadd.s32 %s184, %s185
          %s187 = smul.addr %s186, 4
          %s188 = scalar_lea.vmem %s0, %s187
          %s189 = smul.u32 32, %s22
        $region28: #{tpu_custom_call.1} parent=23 // pred_fallthru
          _
      $region24: #{tpu_custom_call.1} parent=5 // pred_fallthru
        _
      %p190 = scmp.le.s32.totalorder 1, %s14
      %p191 = scmp.lt.s32.totalorder %s14, 3
      %p192 = pnand %p190, %p191
      %p193 = pneg %p192
      // Predicated region
      $region29: #{tpu_custom_call.1} parent=5 // pred_check
        _
      $region30: #{tpu_custom_call.1} parent=5 // pred_check_branch
        %195 = sbr.rel (%p192) target = $region32
      $region31: #{tpu_custom_call.1} parent=5 // pred_region
        %s196 = ssub.s32 %s14, 1
        %s197 = smul.u32 32, %s24
        %p198 = scmp.lt.s32.totalorder %s23, 1
        %s199 = scalar_select %p198, %s23, 1
        %p200 = scmp.lt.s32.totalorder %s197, 31
        %s201 = scalar_select %p200, %s197, 31
        %s202 = smul.addr %s199, 32
        %s203 = sadd.s32 %s201, %s202
        %s204 = smul.addr %s203, 4
        %s205 = scalar_lea.vmem %s0, %s204
        %p206 = pneg %p54
        %p207 = pneg %p51
        %p208 = pneg %p75
        %p209 = pneg %p72
        %p210 = pneg %p96
        %p211 = pneg %p93
        %p212 = pneg %p124
        %p213 = pneg %p121
        %s214 = sand.u32 %s111, 1
        %s215 = scalar_lea.sflag [#allocation3], %s214
        %s216 = sand.u32 %s111, 1
        %s217 = smul.addr %s216, 2
        %s218 = scalar_lea.vmem [#allocation2], %s217
        %p219 = pneg %p152
        %p220 = pneg %p149
        %s221 = smul.u32 32, %s24
        %p222 = scmp.lt.s32.totalorder %s23, 1
        %s223 = scalar_select %p222, %s23, 1
        %p224 = scmp.lt.s32.totalorder %s221, 31
        %s225 = scalar_select %p224, %s221, 31
        %s226 = smul.addr %s223, 32
        %s227 = sadd.s32 %s225, %s226
        %s228 = smul.addr %s227, 4
        %s229 = scalar_lea.vmem %s4, %s228
        %s230 = smul.u32 32, %s24
        %p231 = scmp.lt.s32.totalorder %s23, 1
        %s232 = scalar_select %p231, %s23, 1
        %p233 = scmp.lt.s32.totalorder %s230, 31
        %s234 = scalar_select %p233, %s230, 31
        %s235 = smul.addr %s232, 32
        %s236 = sadd.s32 %s234, %s235
        %s237 = smul.addr %s236, 4
        %s238 = scalar_lea.vmem %s0, %s237
        %s239 = smul.u32 32, %s24
        %s240 = smul.u32 2, %s24
        %s241 = smul.u32 32, %s24
        %p242 = scmp.lt.s32.totalorder %s23, 1
        %s243 = scalar_select %p242, %s23, 1
        %p244 = scmp.lt.s32.totalorder %s241, 31
        %s245 = scalar_select %p244, %s241, 31
        %s246 = smul.addr %s243, 32
        %s247 = sadd.s32 %s245, %s246
        %s248 = smul.addr %s247, 4
        %s249 = scalar_lea.vmem %s4, %s248
        %s250 = smul.u32 32, %s24
        %v252 = vld [vmem:[%s238] sm:$0xf]
        %v253 = vld [vmem:[%s238 + $0x4] sm:$0xf]
        %v254 = vld [vmem:[%s238 + $0x8] sm:$0xf]
        %v255 = vld [vmem:[%s238 + $0xc] sm:$0xf]
        %v256 = vld [vmem:[%s238 + $0x10] sm:$0xf]
        %v257 = vld [vmem:[%s238 + $0x14] sm:$0xf]
        %v258 = vld [vmem:[%s238 + $0x18] sm:$0xf]
        %v259 = vld [vmem:[%s238 + $0x1c] sm:$0xf]
        %v260 = vld [vmem:[%s238 + $0x20] sm:$0xf]
        %v261 = vld [vmem:[%s238 + $0x24] sm:$0xf]
        %v262 = vld [vmem:[%s238 + $0x28] sm:$0xf]
        %v263 = vld [vmem:[%s238 + $0x2c] sm:$0xf]
        %v264 = vld [vmem:[%s238 + $0x30] sm:$0xf]
        %v265 = vld [vmem:[%s238 + $0x34] sm:$0xf]
        %v266 = vld [vmem:[%s238 + $0x38] sm:$0xf]
        %v267 = vld [vmem:[%s238 + $0x3c] sm:$0xf]
        %v268 = vld [vmem:[%s238 + $0x40] sm:$0xf]
        %v269 = vld [vmem:[%s238 + $0x44] sm:$0xf]
        %v270 = vld [vmem:[%s238 + $0x48] sm:$0xf]
        %v271 = vld [vmem:[%s238 + $0x4c] sm:$0xf]
        %v272 = vld [vmem:[%s238 + $0x50] sm:$0xf]
        %v273 = vld [vmem:[%s238 + $0x54] sm:$0xf]
        %v274 = vld [vmem:[%s238 + $0x58] sm:$0xf]
        %v275 = vld [vmem:[%s238 + $0x5c] sm:$0xf]
        %v276 = vld [vmem:[%s238 + $0x60] sm:$0xf]
        %v277 = vld [vmem:[%s238 + $0x64] sm:$0xf]
        %v278 = vld [vmem:[%s238 + $0x68] sm:$0xf]
        %v279 = vld [vmem:[%s238 + $0x6c] sm:$0xf]
        %v280 = vld [vmem:[%s238 + $0x70] sm:$0xf]
        %v281 = vld [vmem:[%s238 + $0x74] sm:$0xf]
        %v282 = vld [vmem:[%s238 + $0x78] sm:$0xf]
        %v283 = vld [vmem:[%s238 + $0x7c] sm:$0xf]
        %v284 = vld [vmem:[%s1] sm:$0x1]
        %v317 = vunpack.c.l.b16 %v252
        %v318 = vunpack.c.l.b16 %v253
        %v319 = vunpack.c.l.b16 %v254
        %v320 = vunpack.c.l.b16 %v255
        %v321 = vunpack.c.l.b16 %v256
        %v322 = vunpack.c.l.b16 %v257
        %v323 = vunpack.c.l.b16 %v258
        %v324 = vunpack.c.l.b16 %v259
        %v325 = vunpack.c.l.b16 %v260
        %v326 = vunpack.c.l.b16 %v261
        %v327 = vunpack.c.l.b16 %v262
        %v328 = vunpack.c.l.b16 %v263
        %v329 = vunpack.c.l.b16 %v264
        %v330 = vunpack.c.l.b16 %v265
        %v331 = vunpack.c.l.b16 %v266
        %v332 = vunpack.c.l.b16 %v267
        %v333 = vunpack.c.l.b16 %v268
        %v334 = vunpack.c.l.b16 %v269
        %v335 = vunpack.c.l.b16 %v270
        %v336 = vunpack.c.l.b16 %v271
        %v337 = vunpack.c.l.b16 %v272
        %v338 = vunpack.c.l.b16 %v273
        %v339 = vunpack.c.l.b16 %v274
        %v340 = vunpack.c.l.b16 %v275
        %v341 = vunpack.c.l.b16 %v276
        %v342 = vunpack.c.l.b16 %v277
        %v343 = vunpack.c.l.b16 %v278
        %v344 = vunpack.c.l.b16 %v279
        %v345 = vunpack.c.l.b16 %v280
        %v346 = vunpack.c.l.b16 %v281
        %v347 = vunpack.c.l.b16 %v282
        %v348 = vunpack.c.l.b16 %v283
        %v349 = vpack.c.b16 %v318, %v317
        %v350 = vpack.c.b16 %v320, %v319
        %v351 = vpack.c.b16 %v322, %v321
        %v352 = vpack.c.b16 %v324, %v323
        %v353 = vpack.c.b16 %v326, %v325
        %v354 = vpack.c.b16 %v328, %v327
        %v355 = vpack.c.b16 %v330, %v329
        %v356 = vpack.c.b16 %v332, %v331
        %v357 = vpack.c.b16 %v334, %v333
        %v358 = vpack.c.b16 %v336, %v335
        %v359 = vpack.c.b16 %v338, %v337
        %v360 = vpack.c.b16 %v340, %v339
        %v361 = vpack.c.b16 %v342, %v341
        %v362 = vpack.c.b16 %v344, %v343
        %v363 = vpack.c.b16 %v346, %v345
        %v364 = vpack.c.b16 %v348, %v347
        %vm365 = vcmask 130048
        %v367 = vsel %vm365, %v284, 0
        %v370 = vsel %vm365, %v349, 0
        %v373 = vsel %vm365, %v350, 0
        %v376 = vsel %vm365, %v351, 0
        %v379 = vsel %vm365, %v352, 0
        %v382 = vsel %vm365, %v353, 0
        %v385 = vsel %vm365, %v354, 0
        %v388 = vsel %vm365, %v355, 0
        %v391 = vsel %vm365, %v356, 0
        %v394 = vsel %vm365, %v357, 0
        %v397 = vsel %vm365, %v358, 0
        %v400 = vsel %vm365, %v359, 0
        %v403 = vsel %vm365, %v360, 0
        %v406 = vsel %vm365, %v361, 0
        %v409 = vsel %vm365, %v362, 0
        %v412 = vsel %vm365, %v363, 0
        %v415 = vsel %vm365, %v364, 0
        %417 = vmatprep.subr.bf16.mxu0 0
        %418 = vmatpush1.bf16.xpose.msra.mxu0 %v370
        %419 = vmatprep.subr.bf16.mxu0 0
        %420 = vmatpush1.bf16.xpose.msra.mxu0 %v373
        %421 = vmatprep.subr.bf16.mxu0 0
        %422 = vmatpush1.bf16.xpose.msra.mxu0 %v376
        %423 = vmatprep.subr.bf16.mxu0 0
        %424 = vmatpush1.bf16.xpose.msra.mxu0 %v379
        %425 = vmatprep.subr.bf16.mxu0 0
        %426 = vmatpush1.bf16.xpose.msra.mxu0 %v382
        %427 = vmatprep.subr.bf16.mxu0 0
        %428 = vmatpush1.bf16.xpose.msra.mxu0 %v385
        %429 = vmatprep.subr.bf16.mxu0 0
        %430 = vmatpush1.bf16.xpose.msra.mxu0 %v388
        %431 = vmatprep.subr.bf16.mxu0 0
        %432 = vmatpush1.bf16.xpose.msra.mxu0 %v391
        %433 = vmatprep.subr.bf16.mxu0 0
        %434 = vmatpush1.bf16.xpose.msra.mxu0 %v394
        %435 = vmatprep.subr.bf16.mxu0 0
        %436 = vmatpush1.bf16.xpose.msra.mxu0 %v397
        %437 = vmatprep.subr.bf16.mxu0 0
        %438 = vmatpush1.bf16.xpose.msra.mxu0 %v400
        %439 = vmatprep.subr.bf16.mxu0 0
        %440 = vmatpush1.bf16.xpose.msra.mxu0 %v403
        %441 = vmatprep.subr.bf16.mxu0 0
        %442 = vmatpush1.bf16.xpose.msra.mxu0 %v406
        %443 = vmatprep.subr.bf16.mxu0 0
        %444 = vmatpush1.bf16.xpose.msra.mxu0 %v409
        %445 = vmatprep.subr.bf16.mxu0 0
        %446 = vmatpush1.bf16.xpose.msra.mxu0 %v412
        %447 = vmatprep.subr.bf16.mxu0 0
        %448 = vmatpush1.bf16.xpose.msra.mxu0 %v415
        %449 = vmatprep.mubr.bf16.mxu0 0
        %450 = vmatmul.mubr.bf16.gmra.mrb[0].mxu0 %v367
        %v451 = vpop.f32.mrb[0].mxu0
        %v452 = vadd.f32 0.0, %v451
        %v453 = vpop.f32.mrb[0].mxu0
        %v454 = vadd.f32 0.0, %v453
        %v455 = vpop.f32.mrb[0].mxu0
        %v456 = vpop.f32.mrb[0].mxu0
        %457 = vdwg.mxu0
        %v458 = vpack.c.bf16 %v452, %v452
        %v459 = vpack.c.bf16 %v454, %v454
        %v462 = vcombine.low %v458, %v459
        %v464 = vunpack.c.l.s4 1966171168
        %v465 = vunpack.c.0.s8 %v464
        %v466 = vlaneseq
        %v467 = vshrl.u32 %v466, 7
        %v468 = vsub.s32 %v465, %v467
        %v469 = vrot.slane %v462, %v468
        %v471 = vunpack.c.l.s4 1966171168
        %v472 = vunpack.c.0.s8 %v471
        %v473 = vlaneseq
        %v474 = vshrl.u32 %v473, 7
        %v475 = vsub.s32 %v472, %v474
        %v476 = vrot.slane %v469, %v475
        %478 = vst [vmem:[%s218] sm:$0x3] %v476
        %v479 = vld [vmem:[%s2] sm:$0xf]
        %v480 = vld [vmem:[%s2 + $0x4] sm:$0xf]
        %v483 = vunpack.c.l.b16 %v479
        %v484 = vunpack.c.l.b16 %v480
        %v485 = vpack.c.b16 %v484, %v483
        %487 = vmatprep.subr.bf16.mxu0 0
        %488 = vmatpush1.bf16.msra.mxu0 %v485
        %489 = vmatprep.subr.bf16.mxu0 0
        %490 = vmatpush1.bf16.msra.mxu0 0
        %491 = vmatprep.subr.bf16.mxu0 0
        %492 = vmatpush1.bf16.msra.mxu0 0
        %493 = vmatprep.subr.bf16.mxu0 0
        %494 = vmatpush1.bf16.msra.mxu0 0
        %495 = vmatprep.subr.bf16.mxu0 0
        %496 = vmatpush1.bf16.msra.mxu0 0
        %497 = vmatprep.subr.bf16.mxu0 0
        %498 = vmatpush1.bf16.msra.mxu0 0
        %499 = vmatprep.subr.bf16.mxu0 0
        %500 = vmatpush1.bf16.msra.mxu0 0
        %501 = vmatprep.subr.bf16.mxu0 0
        %502 = vmatpush1.bf16.msra.mxu0 0
        %503 = vmatprep.subr.bf16.mxu0 0
        %504 = vmatpush1.bf16.msra.mxu0 0
        %505 = vmatprep.subr.bf16.mxu0 0
        %506 = vmatpush1.bf16.msra.mxu0 0
        %507 = vmatprep.subr.bf16.mxu0 0
        %508 = vmatpush1.bf16.msra.mxu0 0
        %509 = vmatprep.subr.bf16.mxu0 0
        %510 = vmatpush1.bf16.msra.mxu0 0
        %511 = vmatprep.subr.bf16.mxu0 0
        %512 = vmatpush1.bf16.msra.mxu0 0
        %513 = vmatprep.subr.bf16.mxu0 0
        %514 = vmatpush1.bf16.msra.mxu0 0
        %515 = vmatprep.subr.bf16.mxu0 0
        %516 = vmatpush1.bf16.msra.mxu0 0
        %517 = vmatprep.subr.bf16.mxu0 0
        %518 = vmatpush1.bf16.msra.mxu0 0
        %519 = vmatprep.mubr.bf16.mxu0 0
        %520 = vmatmul.mubr.bf16.gmra.mrb[0].mxu0 %v370
        %v521 = vpop.f32.mrb[0].mxu0
        %v522 = vadd.f32 0.0, %v521
        %v523 = vpop.f32.mrb[0].mxu0
        %v524 = vpop.f32.mrb[0].mxu0
        %v525 = vadd.f32 0.0, %v524
        %v526 = vpop.f32.mrb[0].mxu0
        %527 = vmatprep.mubr.bf16.mxu0 0
        %528 = vmatmul.mubr.bf16.gmra.mrb[0].mxu0 %v373
        %v529 = vpop.f32.mrb[0].mxu0
        %v530 = vadd.f32 0.0, %v529
        %v531 = vpop.f32.mrb[0].mxu0
        %v532 = vpop.f32.mrb[0].mxu0
        %v533 = vadd.f32 0.0, %v532
        %v534 = vpop.f32.mrb[0].mxu0
        %535 = vmatprep.mubr.bf16.mxu0 0
        %536 = vmatmul.mubr.bf16.gmra.mrb[0].mxu0 %v376
        %v537 = vpop.f32.mrb[0].mxu0
        %v538 = vadd.f32 0.0, %v537
        %v539 = vpop.f32.mrb[0].mxu0
        %v540 = vpop.f32.mrb[0].mxu0
        %v541 = vadd.f32 0.0, %v540
        %v542 = vpop.f32.mrb[0].mxu0
        %543 = vmatprep.mubr.bf16.mxu0 0
        %544 = vmatmul.mubr.bf16.gmra.mrb[0].mxu0 %v379
        %v545 = vpop.f32.mrb[0].mxu0
        %v546 = vadd.f32 0.0, %v545
        %v547 = vpop.f32.mrb[0].mxu0
        %v548 = vpop.f32.mrb[0].mxu0
        %v549 = vadd.f32 0.0, %v548
        %v550 = vpop.f32.mrb[0].mxu0
        %551 = vmatprep.mubr.bf16.mxu0 0
        %552 = vmatmul.mubr.bf16.gmra.mrb[0].mxu0 %v382
        %v553 = vpop.f32.mrb[0].mxu0
        %v554 = vadd.f32 0.0, %v553
        %v555 = vpop.f32.mrb[0].mxu0
        %v556 = vpop.f32.mrb[0].mxu0
        %v557 = vadd.f32 0.0, %v556
        %v558 = vpop.f32.mrb[0].mxu0
        %559 = vmatprep.mubr.bf16.mxu0 0
        %560 = vmatmul.mubr.bf16.gmra.mrb[0].mxu0 %v385
        %v561 = vpop.f32.mrb[0].mxu0
        %v562 = vadd.f32 0.0, %v561
        %v563 = vpop.f32.mrb[0].mxu0
        %v564 = vpop.f32.mrb[0].mxu0
        %v565 = vadd.f32 0.0, %v564
        %v566 = vpop.f32.mrb[0].mxu0
        %567 = vmatprep.mubr.bf16.mxu0 0
        %568 = vmatmul.mubr.bf16.gmra.mrb[0].mxu0 %v388
        %v569 = vpop.f32.mrb[0].mxu0
        %v570 = vadd.f32 0.0, %v569
        %v571 = vpop.f32.mrb[0].mxu0
        %v572 = vpop.f32.mrb[0].mxu0
        %v573 = vadd.f32 0.0, %v572
        %v574 = vpop.f32.mrb[0].mxu0
        %575 = vmatprep.mubr.bf16.mxu0 0
        %576 = vmatmul.mubr.bf16.gmra.mrb[0].mxu0 %v391
        %v577 = vpop.f32.mrb[0].mxu0
        %v578 = vadd.f32 0.0, %v577
        %v579 = vpop.f32.mrb[0].mxu0
        %v580 = vpop.f32.mrb[0].mxu0
        %v581 = vadd.f32 0.0, %v580
        %v582 = vpop.f32.mrb[0].mxu0
        %583 = vmatprep.mubr.bf16.mxu0 0
        %584 = vmatmul.mubr.bf16.gmra.mrb[0].mxu0 %v394
        %v585 = vpop.f32.mrb[0].mxu0
        %v586 = vadd.f32 0.0, %v585
        %v587 = vpop.f32.mrb[0].mxu0
        %v588 = vpop.f32.mrb[0].mxu0
        %v589 = vadd.f32 0.0, %v588
        %v590 = vpop.f32.mrb[0].mxu0
        %591 = vmatprep.mubr.bf16.mxu0 0
        %592 = vmatmul.mubr.bf16.gmra.mrb[0].mxu0 %v397
        %v593 = vpop.f32.mrb[0].mxu0
        %v594 = vadd.f32 0.0, %v593
        %v595 = vpop.f32.mrb[0].mxu0
        %v596 = vpop.f32.mrb[0].mxu0
        %v597 = vadd.f32 0.0, %v596
        %v598 = vpop.f32.mrb[0].mxu0
        %599 = vmatprep.mubr.bf16.mxu0 0
        %600 = vmatmul.mubr.bf16.gmra.mrb[0].mxu0 %v400
        %v601 = vpop.f32.mrb[0].mxu0
        %v602 = vadd.f32 0.0, %v601
        %v603 = vpop.f32.mrb[0].mxu0
        %v604 = vpop.f32.mrb[0].mxu0
        %v605 = vadd.f32 0.0, %v604
        %v606 = vpop.f32.mrb[0].mxu0
        %607 = vmatprep.mubr.bf16.mxu0 0
        %608 = vmatmul.mubr.bf16.gmra.mrb[0].mxu0 %v403
        %v609 = vpop.f32.mrb[0].mxu0
        %v610 = vadd.f32 0.0, %v609
        %v611 = vpop.f32.mrb[0].mxu0
        %v612 = vpop.f32.mrb[0].mxu0
        %v613 = vadd.f32 0.0, %v612
        %v614 = vpop.f32.mrb[0].mxu0
        %615 = vmatprep.mubr.bf16.mxu0 0
        %616 = vmatmul.mubr.bf16.gmra.mrb[0].mxu0 %v406
        %v617 = vpop.f32.mrb[0].mxu0
        %v618 = vadd.f32 0.0, %v617
        %v619 = vpop.f32.mrb[0].mxu0
        %v620 = vpop.f32.mrb[0].mxu0
        %v621 = vadd.f32 0.0, %v620
        %v622 = vpop.f32.mrb[0].mxu0
        %623 = vmatprep.mubr.bf16.mxu0 0
        %624 = vmatmul.mubr.bf16.gmra.mrb[0].mxu0 %v409
        %v625 = vpop.f32.mrb[0].mxu0
        %v626 = vadd.f32 0.0, %v625
        %v627 = vpop.f32.mrb[0].mxu0
        %v628 = vpop.f32.mrb[0].mxu0
        %v629 = vadd.f32 0.0, %v628
        %v630 = vpop.f32.mrb[0].mxu0
        %631 = vmatprep.mubr.bf16.mxu0 0
        %632 = vmatmul.mubr.bf16.gmra.mrb[0].mxu0 %v412
        %v633 = vpop.f32.mrb[0].mxu0
        %v634 = vadd.f32 0.0, %v633
        %v635 = vpop.f32.mrb[0].mxu0
        %v636 = vpop.f32.mrb[0].mxu0
        %v637 = vadd.f32 0.0, %v636
        %v638 = vpop.f32.mrb[0].mxu0
        %639 = vmatprep.mubr.bf16.mxu0 0
        %640 = vmatmul.mubr.bf16.gmra.mrb[0].mxu0 %v415
        %v641 = vpop.f32.mrb[0].mxu0
        %v642 = vadd.f32 0.0, %v641
        %v643 = vpop.f32.mrb[0].mxu0
        %v644 = vpop.f32.mrb[0].mxu0
        %v645 = vadd.f32 0.0, %v644
        %v646 = vpop.f32.mrb[0].mxu0
        %647 = vdwg.mxu0
        %v648 = vpack.c.bf16 %v525, %v522
        %v649 = vpack.c.bf16 %v533, %v530
        %v650 = vpack.c.bf16 %v541, %v538
        %v651 = vpack.c.bf16 %v549, %v546
        %v652 = vpack.c.bf16 %v557, %v554
        %v653 = vpack.c.bf16 %v565, %v562
        %v654 = vpack.c.bf16 %v573, %v570
        %v655 = vpack.c.bf16 %v581, %v578
        %v656 = vpack.c.bf16 %v589, %v586
        %v657 = vpack.c.bf16 %v597, %v594
        %v658 = vpack.c.bf16 %v605, %v602
        %v659 = vpack.c.bf16 %v613, %v610
        %v660 = vpack.c.bf16 %v621, %v618
        %v661 = vpack.c.bf16 %v629, %v626
        %v662 = vpack.c.bf16 %v637, %v634
        %v663 = vpack.c.bf16 %v645, %v642
        %v680 = vunpack.c.l.b16 %v648
        %v681 = vunpack.c.h.b16 %v648
        %v682 = vunpack.c.l.b16 %v649
        %v683 = vunpack.c.h.b16 %v649
        %v684 = vunpack.c.l.b16 %v650
        %v685 = vunpack.c.h.b16 %v650
        %v686 = vunpack.c.l.b16 %v651
        %v687 = vunpack.c.h.b16 %v651
        %v688 = vunpack.c.l.b16 %v652
        %v689 = vunpack.c.h.b16 %v652
        %v690 = vunpack.c.l.b16 %v653
        %v691 = vunpack.c.h.b16 %v653
        %v692 = vunpack.c.l.b16 %v654
        %v693 = vunpack.c.h.b16 %v654
        %v694 = vunpack.c.l.b16 %v655
        %v695 = vunpack.c.h.b16 %v655
        %v696 = vunpack.c.l.b16 %v656
        %v697 = vunpack.c.h.b16 %v656
        %v698 = vunpack.c.l.b16 %v657
        %v699 = vunpack.c.h.b16 %v657
        %v700 = vunpack.c.l.b16 %v658
        %v701 = vunpack.c.h.b16 %v658
        %v702 = vunpack.c.l.b16 %v659
        %v703 = vunpack.c.h.b16 %v659
        %v704 = vunpack.c.l.b16 %v660
        %v705 = vunpack.c.h.b16 %v660
        %v706 = vunpack.c.l.b16 %v661
        %v707 = vunpack.c.h.b16 %v661
        %v708 = vunpack.c.l.b16 %v662
        %v709 = vunpack.c.h.b16 %v662
        %v710 = vunpack.c.l.b16 %v663
        %v711 = vunpack.c.h.b16 %v663
        %v712 = vpack.c.b16 %v680, %v680
        %v713 = vpack.c.b16 %v681, %v681
        %v714 = vpack.c.b16 %v682, %v682
        %v715 = vpack.c.b16 %v683, %v683
        %v716 = vpack.c.b16 %v684, %v684
        %v717 = vpack.c.b16 %v685, %v685
        %v718 = vpack.c.b16 %v686, %v686
        %v719 = vpack.c.b16 %v687, %v687
        %v720 = vpack.c.b16 %v688, %v688
        %v721 = vpack.c.b16 %v689, %v689
        %v722 = vpack.c.b16 %v690, %v690
        %v723 = vpack.c.b16 %v691, %v691
        %v724 = vpack.c.b16 %v692, %v692
        %v725 = vpack.c.b16 %v693, %v693
        %v726 = vpack.c.b16 %v694, %v694
        %v727 = vpack.c.b16 %v695, %v695
        %v728 = vpack.c.b16 %v696, %v696
        %v729 = vpack.c.b16 %v697, %v697
        %v730 = vpack.c.b16 %v698, %v698
        %v731 = vpack.c.b16 %v699, %v699
        %v732 = vpack.c.b16 %v700, %v700
        %v733 = vpack.c.b16 %v701, %v701
        %v734 = vpack.c.b16 %v702, %v702
        %v735 = vpack.c.b16 %v703, %v703
        %v736 = vpack.c.b16 %v704, %v704
        %v737 = vpack.c.b16 %v705, %v705
        %v738 = vpack.c.b16 %v706, %v706
        %v739 = vpack.c.b16 %v707, %v707
        %v740 = vpack.c.b16 %v708, %v708
        %v741 = vpack.c.b16 %v709, %v709
        %v742 = vpack.c.b16 %v710, %v710
        %v743 = vpack.c.b16 %v711, %v711
        %vm776 = vcmask 125952
        %777 = vst.msk [vmem:[%s249] sm:$0xf] %vm776, %v712
        %778 = vst.msk [vmem:[%s249 + $0x4] sm:$0xf] %vm776, %v713
        %779 = vst.msk [vmem:[%s249 + $0x8] sm:$0xf] %vm776, %v714
        %780 = vst.msk [vmem:[%s249 + $0xc] sm:$0xf] %vm776, %v715
        %781 = vst.msk [vmem:[%s249 + $0x10] sm:$0xf] %vm776, %v716
        %782 = vst.msk [vmem:[%s249 + $0x14] sm:$0xf] %vm776, %v717
        %783 = vst.msk [vmem:[%s249 + $0x18] sm:$0xf] %vm776, %v718
        %784 = vst.msk [vmem:[%s249 + $0x1c] sm:$0xf] %vm776, %v719
        %785 = vst.msk [vmem:[%s249 + $0x20] sm:$0xf] %vm776, %v720
        %786 = vst.msk [vmem:[%s249 + $0x24] sm:$0xf] %vm776, %v721
        %787 = vst.msk [vmem:[%s249 + $0x28] sm:$0xf] %vm776, %v722
        %788 = vst.msk [vmem:[%s249 + $0x2c] sm:$0xf] %vm776, %v723
        %789 = vst.msk [vmem:[%s249 + $0x30] sm:$0xf] %vm776, %v724
        %790 = vst.msk [vmem:[%s249 + $0x34] sm:$0xf] %vm776, %v725
        %791 = vst.msk [vmem:[%s249 + $0x38] sm:$0xf] %vm776, %v726
        %792 = vst.msk [vmem:[%s249 + $0x3c] sm:$0xf] %vm776, %v727
        %793 = vst.msk [vmem:[%s249 + $0x40] sm:$0xf] %vm776, %v728
        %794 = vst.msk [vmem:[%s249 + $0x44] sm:$0xf] %vm776, %v729
        %795 = vst.msk [vmem:[%s249 + $0x48] sm:$0xf] %vm776, %v730
        %796 = vst.msk [vmem:[%s249 + $0x4c] sm:$0xf] %vm776, %v731
        %797 = vst.msk [vmem:[%s249 + $0x50] sm:$0xf] %vm776, %v732
        %798 = vst.msk [vmem:[%s249 + $0x54] sm:$0xf] %vm776, %v733
        %799 = vst.msk [vmem:[%s249 + $0x58] sm:$0xf] %vm776, %v734
        %800 = vst.msk [vmem:[%s249 + $0x5c] sm:$0xf] %vm776, %v735
        %801 = vst.msk [vmem:[%s249 + $0x60] sm:$0xf] %vm776, %v736
        %802 = vst.msk [vmem:[%s249 + $0x64] sm:$0xf] %vm776, %v737
        %803 = vst.msk [vmem:[%s249 + $0x68] sm:$0xf] %vm776, %v738
        %804 = vst.msk [vmem:[%s249 + $0x6c] sm:$0xf] %vm776, %v739
        %805 = vst.msk [vmem:[%s249 + $0x70] sm:$0xf] %vm776, %v740
        %806 = vst.msk [vmem:[%s249 + $0x74] sm:$0xf] %vm776, %v741
        %807 = vst.msk [vmem:[%s249 + $0x78] sm:$0xf] %vm776, %v742
        %808 = vst.msk [vmem:[%s249 + $0x7c] sm:$0xf] %vm776, %v743
        %s809 = sand.u32 %s111, 1
        %s810 = scalar_lea.sflag [#allocation3], %s809
        %s811 = sand.u32 %s111, 1
        %s812 = smul.addr %s811, 2
        %s813 = scalar_lea.vmem [#allocation2], %s812
        %s814 = smul.u32 32, %s24
        %p815 = scmp.lt.s32.totalorder %s23, 1
        %s816 = scalar_select %p815, %s23, 1
        %p817 = scmp.lt.s32.totalorder %s814, 31
        %s818 = scalar_select %p817, %s814, 31
        %s819 = smul.addr %s816, 32
        %s820 = sadd.s32 %s818, %s819
        %s821 = smul.addr %s820, 4
        %s822 = scalar_lea.vmem %s4, %s821
        // Predicated region
        $region33: #{tpu_custom_call.1} parent=31 // pred_check
          %p823 = pneg %p121
        $region34: #{tpu_custom_call.1} parent=31 // pred_check_branch
          %825 = sbr.rel (%p823) target = $region36
        $region35: #{tpu_custom_call.1} parent=31 // pred_region
          %s826 = smul.u32 2, %s24
          %s828 = ssub.s32 32, 32
          %829 = vsyncadd %s810, %s828
          %s830 = smul.addr %s23, 2
          %s831 = sadd.s32 %s826, %s830
          %s832 = smul.addr %s831, 16
          %s833 = scalar_lea.hbm %s3, %s832
          %s835 = sshll.u32 %s813, 4
          %s836 = int_to_ptr.vmem [resolvable:$true] %s835
          %838 = dma.vmem_to_hbm [thread:$0]  %s836, 32, %s833, %s810
        $region36: #{tpu_custom_call.1} parent=31 // pred_fallthru
          _
        // Predicated region
        $region37: #{tpu_custom_call.1} parent=31 // pred_check
          %p839 = pneg %p149
        $region38: #{tpu_custom_call.1} parent=31 // pred_check_branch
          %841 = sbr.rel (%p839) target = $region40
        $region39: #{tpu_custom_call.1} parent=31 // pred_region
          %s842 = smul.u32 32, %s24
        $region40: #{tpu_custom_call.1} parent=31 // pred_fallthru
          _
      $region32: #{tpu_custom_call.1} parent=5 // pred_fallthru
        _
      %p843 = scmp.le.s32.totalorder 2, %s14
      // Predicated region
      $region41: #{tpu_custom_call.1} parent=5 // pred_check
        %p844 = pneg %p843
      $region42: #{tpu_custom_call.1} parent=5 // pred_check_branch
        %846 = sbr.rel (%p844) target = $region44
      $region43: #{tpu_custom_call.1} parent=5 // pred_region
        %s847 = ssub.s32 %s14, 2
        // Predicated region
        $region45: #{tpu_custom_call.1} parent=43 // pred_check
          %p848 = pneg %p127
        $region46: #{tpu_custom_call.1} parent=43 // pred_check_branch
          %850 = sbr.rel (%p848) target = $region48
        $region47: #{tpu_custom_call.1} parent=43 // pred_region
          %s851 = sand.u32 %s112, 1
          %s852 = scalar_lea.sflag [#allocation3], %s851
          %s853 = sand.u32 %s112, 1
          %s854 = smul.addr %s853, 2
          %s855 = scalar_lea.vmem [#allocation2], %s854
          %856 = dma.done %s852, 32
        $region48: #{tpu_custom_call.1} parent=43 // pred_fallthru
          _
        // Predicated region
        $region49: #{tpu_custom_call.1} parent=43 // pred_check
          %p857 = pneg %p155
        $region50: #{tpu_custom_call.1} parent=43 // pred_check_branch
          %859 = sbr.rel (%p857) target = $region52
        $region51: #{tpu_custom_call.1} parent=43 // pred_region
          %s860 = smul.u32 32, %s26
          %p861 = scmp.lt.s32.totalorder %s25, 1
          %s862 = scalar_select %p861, %s25, 1
          %p863 = scmp.lt.s32.totalorder %s860, 31
          %s864 = scalar_select %p863, %s860, 31
          %s865 = smul.addr %s862, 32
          %s866 = sadd.s32 %s864, %s865
          %s867 = smul.addr %s866, 4
          %s868 = scalar_lea.vmem %s4, %s867
        $region52: #{tpu_custom_call.1} parent=43 // pred_fallthru
          _
      $region44: #{tpu_custom_call.1} parent=5 // pred_fallthru
        _
    $region6: #{tpu_custom_call.1} parent=1 // loop_footer
      %s18 = sadd.s32 1, %s14
    $region7: #{tpu_custom_call.1} parent=1 // loop_footer_branch
      %13 = sbr.rel target = $region3
    $region8: #{tpu_custom_call.1} parent=1 // loop_exit
      _
    %869 = vsyncpa [#allocation3], 1
    %s870 = scalar_lea.sflag [#allocation3], 1
    %871 = vsyncpa %s870, 1

</llo_original>
